<compile_context>
chip_gen: v7x
topology: tpu7x:2x2x1
jax: 0.10.0
libtpu: 0.0.40
codegen_flags: <defaults>
</compile_context>

<pallas_src>
import functools
import math

import jax
import jax.numpy as jnp
from jax import lax
from jax.experimental import pallas as pl
from jax.experimental.pallas import tpu as pltpu

# NOTE: torch.half (float16) is replaced by bfloat16 for TPU friendliness.
PARAM_DTYPE = jnp.bfloat16

ONE_HOT_MAX_VOCAB = 1024      # resident one-hot path only below this (v5e-safe)
ONE_HOT_VOCAB_TILE = 512      # vocab-axis tile for the one-hot construction
ONE_HOT_TOKEN_BLOCK = 256     # tokens per grid step, resident path
GATHER_TOKEN_BLOCK = 64       # tokens per grid step, manual-DMA gather path


def _round_up(x: int, m: int) -> int:
    return ((x + m - 1) // m) * m


def _vmem_capacity_bytes() -> int:
    try:
        return int(pltpu.get_tpu_info().vmem_capacity_bytes)
    except Exception:  # pragma: no cover - conservative fallback (v7x per-TC)
        return 64 << 20


# ----------------------------------------------------------------------------
# Path A: small vocab -> table resident in VMEM, gather = one_hot @ table (MXU).
# ----------------------------------------------------------------------------
def _onehot_gather_kernel(ids_ref, w_ref, out_ref, *, scale, vocab_tile):
    # ids_ref: (1, 1, T) int32 (lane-dense ids for this token block)
    # w_ref:   (V, E)    whole table, resident in VMEM
    # out_ref: (T, E)    dense output tile
    t, e = out_ref.shape
    v = w_ref.shape[0]
    ids_row = ids_ref[0]                                   # (1, T) int32

    acc = jnp.zeros((t, e), jnp.float32)
    # Vocab-tiled one-hot: bounds the live (Vb, T) intermediates and VALU work.
    for v0 in range(0, v, vocab_tile):
        vc = min(vocab_tile, v - v0)
        vocab_ids = v0 + lax.broadcasted_iota(jnp.int32, (vc, t), 0)   # (Vb, T)
        onehot_t = (vocab_ids == ids_row).astype(w_ref.dtype)          # (Vb, T)
        # (Vb, T)^T @ (Vb, E) -> (T, E), f32 accumulation on the MXU.
        acc = acc + lax.dot_general(
            onehot_t, w_ref[pl.ds(v0, vc), :],
            dimension_numbers=(((0,), (0,)), ((), ())),
            preferred_element_type=jnp.float32)

    out_ref[...] = (acc * scale).astype(out_ref.dtype)


def _embedding_resident_onehot(ids_flat, weight, scale):
    n = ids_flat.shape[0]
    v, e = weight.shape
    itemsize = jnp.dtype(weight.dtype).itemsize

    t = min(ONE_HOT_TOKEN_BLOCK, _round_up(max(n, 1), 16))
    nb = int(pl.cdiv(n, t))
    n_pad = nb * t
    if n_pad != n:
        # Cheap int32 pad of the ids only; pad id 0 is a valid row.
        ids_flat = jnp.pad(ids_flat, (0, n_pad - n))
    # Lane-dense id blocks: (nb, 1, T) so the block's last two dims are (1, T).
    ids_blocks = ids_flat.reshape(nb, 1, t)

    # Avoid the padded-output + slice round trip whenever n divides the block.
    out_rows = n if n_pad == n else n_pad

    vmem_cap = _vmem_capacity_bytes()
    vmem_limit = int(min(0.8 * vmem_cap, 64 << 20))

    cost = pl.CostEstimate(
        flops=2 * n_pad * v * e,
        transcendentals=0,
        bytes_accessed=v * e * itemsize + out_rows * e * itemsize + 4 * n_pad,
    )

    out = pl.pallas_call(
        functools.partial(_onehot_gather_kernel, scale=scale,
                          vocab_tile=min(ONE_HOT_VOCAB_TILE, v)),
        out_shape=jax.ShapeDtypeStruct((out_rows, e), weight.dtype),
        grid=(nb,),
        in_specs=[
            pl.BlockSpec((1, 1, t), lambda i: (i, 0, 0)),
            # Whole table resident in VMEM: single copy, no double-buffering.
            pl.BlockSpec(memory_space=pltpu.MemorySpace.VMEM),
        ],
        out_specs=pl.BlockSpec((t, e), lambda i: (i, 0)),
        compiler_params=pltpu.CompilerParams(
            dimension_semantics=("parallel",),
            vmem_limit_bytes=vmem_limit),
        cost_estimate=cost,
    )(ids_blocks, weight)

    if out_rows != n:
        out = out[:n]
    return out


# ----------------------------------------------------------------------------
# Path B: large vocab -> batched manual-DMA row gather (weight stays in HBM).
# ----------------------------------------------------------------------------
def _dma_gather_kernel(ids_smem, w_hbm, out_ref, row_buf, row_sems, *, scale,
                       block_tokens):
    # ids_smem: (n_pad,) int32 in SMEM (scalar prefetch)
    # w_hbm:    (V, E) ref left in HBM (memory_space=pl.ANY)
    # out_ref:  (T, E) dense output tile in VMEM
    # row_buf:  (T, E) VMEM scratch holding the gathered rows
    # row_sems: (T,)   DMA semaphores, one per row copy
    i = pl.program_id(0)
    base = i * block_tokens

    copies = []
    # Issue all T row-gather DMAs for this token block up front; they are all
    # in flight concurrently, so the total wait is ~ one HBM latency plus the
    # aggregate bytes over HBM bandwidth (instead of T serialized tiny DMAs).
    for j in range(block_tokens):
        row = ids_smem[base + j]
        cp = pltpu.make_async_copy(
            w_hbm.at[pl.ds(row, 1), :],
            row_buf.at[pl.ds(j, 1), :],
            row_sems.at[j])
        cp.start()
        copies.append(cp)
    for cp in copies:
        cp.wait()

    out_ref[...] = (row_buf[...].astype(jnp.float32) * scale).astype(out_ref.dtype)


def _embedding_dma_gather(ids_flat, weight, scale):
    n = ids_flat.shape[0]
    v, e = weight.shape
    itemsize = jnp.dtype(weight.dtype).itemsize

    t = min(GATHER_TOKEN_BLOCK, _round_up(max(n, 1), 16))
    nb = int(pl.cdiv(n, t))
    n_pad = nb * t
    if n_pad != n:
        ids_flat = jnp.pad(ids_flat, (0, n_pad - n))   # pad id 0 -> valid row
    out_rows = n if n_pad == n else n_pad

    # TODO(synk): for extremely long token streams (>~64K tokens) the SMEM ids
    # prefetch should be chunked across multiple pallas_calls.
    cost = pl.CostEstimate(
        flops=n_pad * e,
        transcendentals=0,
        bytes_accessed=2 * n_pad * e * itemsize + 4 * n_pad,
    )

    out = pl.pallas_call(
        functools.partial(_dma_gather_kernel, scale=scale, block_tokens=t),
        out_shape=jax.ShapeDtypeStruct((out_rows, e), weight.dtype),
        grid_spec=pltpu.PrefetchScalarGridSpec(
            num_scalar_prefetch=1,
            grid=(nb,),
            in_specs=[pl.BlockSpec(memory_space=pl.ANY)],   # weight stays in HBM
            out_specs=pl.BlockSpec((t, e), lambda i, ids_ref: (i, 0)),
            scratch_shapes=[
                pltpu.VMEM((t, e), weight.dtype),
                pltpu.SemaphoreType.DMA((t,)),
            ]),
        compiler_params=pltpu.CompilerParams(
            dimension_semantics=("parallel",)),   # no cross-step state -> 2-TC safe
        cost_estimate=cost,
    )(ids_flat, weight)

    if out_rows != n:
        out = out[:n]
    return out


# ----------------------------------------------------------------------------
# Public wrapper (matches Embedding.forward semantics).
# ----------------------------------------------------------------------------
def embedding_forward(ids: jax.Array, weight: jax.Array) -> jax.Array:
    """ids: (B, S) integer tokens; weight: (V, E). Returns (B, S, E)."""
    b, s = ids.shape
    v, e = weight.shape
    scale = 1.0 / math.sqrt(float(e))
    # Clamp (PyTorch would raise on OOB ids; this avoids an OOB HBM DMA).
    ids_flat = jnp.clip(ids.reshape(-1).astype(jnp.int32), 0, v - 1)

    w_bytes = v * e * jnp.dtype(weight.dtype).itemsize
    vmem_cap = _vmem_capacity_bytes()
    resident_budget = min(vmem_cap // 4, 32 << 20)
    # Working set of the resident kernel: f32 accumulator + double-buffered
    # bf16 output tiles + one-hot / iota intermediates.
    t = ONE_HOT_TOKEN_BLOCK
    working = 8 * t * e + 6 * ONE_HOT_VOCAB_TILE * t
    use_resident = (v <= ONE_HOT_MAX_VOCAB) and (w_bytes + working <= resident_budget)

    if use_resident:
        out_flat = _embedding_resident_onehot(ids_flat, weight, scale)
    else:
        out_flat = _embedding_dma_gather(ids_flat, weight, scale)

    return out_flat.reshape(b, s, e)


if __name__ == "__main__":
    key = jax.random.PRNGKey(0)
    k1, k2, k3, k4 = jax.random.split(key, 4)

    def _check(ids, weight):
        out = jax.block_until_ready(embedding_forward(ids, weight))
        e = weight.shape[1]
        ref = (jnp.take(weight, ids, axis=0).astype(jnp.float32)
               / math.sqrt(e)).astype(weight.dtype)
        assert out.shape == ref.shape, (out.shape, ref.shape)
        assert out.dtype == weight.dtype
        assert jnp.allclose(out.astype(jnp.float32), ref.astype(jnp.float32),
                            atol=1e-2, rtol=1e-2), "kernel/reference mismatch"

    # Case 1: small vocab -> resident one-hot MXU gather (Path A).
    V1, E1, B1, S1 = 256, 128, 2, 8
    w1 = jax.random.normal(k1, (V1, E1), dtype=jnp.float32).astype(PARAM_DTYPE)
    ids1 = jax.random.randint(k2, (B1, S1), 0, V1, dtype=jnp.int32)
    _check(ids1, w1)

    # Case 2: larger vocab -> batched manual-DMA row gather (Path B).
    V2, E2, B2, S2 = 4096, 128, 2, 64
    w2 = jax.random.normal(k3, (V2, E2), dtype=jnp.float32).astype(PARAM_DTYPE)
    ids2 = jax.random.randint(k4, (B2, S2), 0, V2, dtype=jnp.int32)
    _check(ids2, w2)

    print("KERNEL_OK")
</pallas_src>

<mosaic_0001>
module attributes {stable_mosaic.version = 11 : i64} {
  func.func @_onehot_gather_kernel(%arg0: i32, %arg1: memref<1x1x16xi32, #tpu.memory_space<vmem>>, %arg2: memref<256x128xbf16, #tpu.memory_space<vmem>>, %arg3: memref<16x128xbf16, #tpu.memory_space<vmem>>) attributes {dimension_semantics = [#tpu.dimension_semantics<parallel>], iteration_bounds = array<i64: 1>, scalar_prefetch = 0 : i64, scratch_operands = 0 : i64, tpu.core_type = #tpu.core_type<tc>, window_params = [{transform_indices = @transform_0, window_bounds = array<i64: 1, 1, 16>}, {pipeline_mode = #tpu.pipeline_mode<synchronous>, transform_indices = @transform_1, window_bounds = array<i64: 256, 128>}, {transform_indices = @transform_2, window_bounds = array<i64: 16, 128>}]} {
    %c0 = arith.constant 0 : index
    %c0_0 = arith.constant 0 : index
    %c0_1 = arith.constant 0 : index
    %0 = vector.load %arg1[%c0, %c0_0, %c0_1] : memref<1x1x16xi32, #tpu.memory_space<vmem>>, vector<1x1x16xi32>
    %1 = vector.shape_cast %0 : vector<1x1x16xi32> to vector<1x16xi32>
    %cst = arith.constant 0.000000e+00 : f32
    %2 = vector.broadcast %cst : f32 to vector<16x128xf32>
    %3 = tpu.iota {dimensions = array<i32: 0>} : vector<256x16xi32>
    %c0_i32 = arith.constant 0 : i32
    %4 = vector.broadcast %c0_i32 : i32 to vector<256x16xi32>
    %5 = arith.addi %4, %3 : vector<256x16xi32>
    %6 = vector.broadcast %1 : vector<1x16xi32> to vector<256x16xi32>
    %7 = arith.cmpi eq, %5, %6 : vector<256x16xi32>
    %8 = arith.extui %7 : vector<256x16xi1> to vector<256x16xi32>
    %9 = arith.sitofp %8 : vector<256x16xi32> to vector<256x16xf32>
    %10 = arith.truncf %9 : vector<256x16xf32> to vector<256x16xbf16>
    %c0_2 = arith.constant 0 : index
    %c0_3 = arith.constant 0 : index
    %11 = vector.load %arg2[%c0_2, %c0_3] : memref<256x128xbf16, #tpu.memory_space<vmem>>, vector<256x128xbf16>
    %cst_4 = arith.constant dense<0.000000e+00> : vector<16x128xf32>
    %12 = tpu.matmul %10, %11, %cst_4 {dimension_numbers = #tpu.dot_dimension_numbers<[0], [0], [1], [1], [0, 1, 1, 1], [], []>} : vector<256x16xbf16>, vector<256x128xbf16>, vector<16x128xf32> -> vector<16x128xf32>
    %13 = arith.addf %2, %12 : vector<16x128xf32>
    %cst_5 = arith.constant 0.0883883461 : f32
    %14 = vector.broadcast %cst_5 : f32 to vector<16x128xf32>
    %15 = arith.mulf %13, %14 : vector<16x128xf32>
    %16 = arith.truncf %15 : vector<16x128xf32> to vector<16x128xbf16>
    %c0_6 = arith.constant 0 : index
    %c0_7 = arith.constant 0 : index
    %17 = vector.load %arg3[%c0_6, %c0_7] : memref<16x128xbf16, #tpu.memory_space<vmem>>, vector<16x128xbf16>
    tpu.vector_store %arg3[%c0_6, %c0_7], %16 {strides = array<i32>} : memref<16x128xbf16, #tpu.memory_space<vmem>>, vector<16x128xbf16>,
    return
  }
  func.func @transform_0(%arg0: i32) -> (i32, i32, i32) {
    %c0_i32 = arith.constant 0 : i32
    %c0_i32_0 = arith.constant 0 : i32
    %c0_i32_1 = arith.constant 0 : i32
    return %arg0, %c0_i32, %c0_i32_0 : i32, i32, i32
  }
  func.func @transform_1(%arg0: i32) -> (i32, i32) {
    %c0_i32 = arith.constant 0 : i32
    %c0_i32_0 = arith.constant 0 : i32
    %c0_i32_1 = arith.constant 0 : i32
    return %c0_i32, %c0_i32_0 : i32, i32
  }
  func.func @transform_2(%arg0: i32) -> (i32, i32) {
    %c0_i32 = arith.constant 0 : i32
    %c0_i32_0 = arith.constant 0 : i32
    return %arg0, %c0_i32 : i32, i32
  }
}

</mosaic_0001>

<llo_original>
// kernel: tpu_custom_call.1
$region0: #{tpu_custom_call.1}
  #allocation0 [shape = 'u32[]', space=smem, size = 0x4, offset = 0x4, fixed_abs, tag = 'smem constant byte address 0x4 - core index']
  #allocation1 [shape = 'u32[144,128]{1,0:T(1,128)}', space=vmem, size = 0x12000, scoped, tag = 'internal scratch']
  %s0 = inlined_call_operand.hbm [shape: s32[1,1,16], index: 0, kind: input, shape index: {}]
  %s1 = inlined_call_operand.hbm [shape: bf16[256,128], index: 1, kind: input, shape index: {}]
  %s2 = inlined_call_operand.hbm [shape: bf16[16,128], index: 2, kind: output, shape index: {}]
  %s3 = sld [smem:[#allocation0]]
  $region26: #{tpu_custom_call.1} parent=0
    _
  %s5 = ssub.s32 1, %s3
  %s6 = scalar_select 0, %s5, %s3
  $region1: #{tpu_custom_call.1} parent=0
    #allocation2 [shape = 'u8[512]{0}', space=vmem, size = 0x400, scoped, tag = 'input window, operand 0, single buffered']
    #allocation3 [shape = 's32[1]{0}', space=sflag, size = 0x4, scoped, tag = 'scoped memory for tpu_custom_call.1']
    #allocation4 [shape = 's32[1]{0}', space=sflag, size = 0x4, scoped, tag = 'scoped memory for tpu_custom_call.1']
    #allocation5 [shape = 'u8[65536]{0}', space=vmem, size = 0x10000, scoped, tag = 'input window, operand 1, single buffered']
    #allocation6 [shape = 's32[1]{0}', space=sflag, size = 0x4, scoped, tag = 'scoped memory for tpu_custom_call.1']
    #allocation7 [shape = 'u8[4096]{0}', space=vmem, size = 0x1000, scoped, tag = 'output window, operand 0, single buffered']
    %7 = vsyncpa [#allocation3], 0
    %8 = vsyncpa [#allocation6], 0
    %9 = vsyncpa [#allocation4], 0
    // Predicated region
    $region2: #{tpu_custom_call.1} parent=1 // pred_check
      _
    $region3: #{tpu_custom_call.1} parent=1 // pred_check_branch
      %11 = sbr.rel (0) target = $region5
    $region4: #{tpu_custom_call.1} parent=1 // pred_region
      %s13 = ssub.s32 16, 16
      %14 = vsyncadd [#allocation3], %s13
      %s16 = sshll.u32 [#allocation2], 4
      %s17 = int_to_ptr.vmem [resolvable:$true] %s16
      %19 = dma.hbm_to_vmem [thread:$0]  %s0, 16, %s17, [#allocation3]
    $region5: #{tpu_custom_call.1} parent=1 // pred_fallthru
      _
    // Predicated region
    $region6: #{tpu_custom_call.1} parent=1 // pred_check
      _
    $region7: #{tpu_custom_call.1} parent=1 // pred_check_branch
      %21 = sbr.rel (0) target = $region9
    $region8: #{tpu_custom_call.1} parent=1 // pred_region
      %s23 = ssub.s32 2048, 2048
      %24 = vsyncadd [#allocation6], %s23
      %s25 = sshll.u32 [#allocation5], 4
      %s26 = int_to_ptr.vmem [resolvable:$true] %s25
      %31 = dma.hbm_to_vmem [thread:$0]  %s1, 2048, %s26, [#allocation6], 64, 64, 4
    $region9: #{tpu_custom_call.1} parent=1 // pred_fallthru
      _
    // Predicated region
    $region10: #{tpu_custom_call.1} parent=1 // pred_check
      _
    $region11: #{tpu_custom_call.1} parent=1 // pred_check_branch
      %33 = sbr.rel (0) target = $region13
    $region12: #{tpu_custom_call.1} parent=1 // pred_region
      %34 = dma.done [#allocation3], 16
    $region13: #{tpu_custom_call.1} parent=1 // pred_fallthru
      _
    // Predicated region
    $region14: #{tpu_custom_call.1} parent=1 // pred_check
      _
    $region15: #{tpu_custom_call.1} parent=1 // pred_check_branch
      %36 = sbr.rel (0) target = $region17
    $region16: #{tpu_custom_call.1} parent=1 // pred_region
      %37 = dma.done [#allocation6], 2048
    $region17: #{tpu_custom_call.1} parent=1 // pred_fallthru
      _
    %v39 = vld [vmem:[#allocation2] sm:$0x1]
    %v40 = vlaneseq
    %v41 = vshrl.u32 %v40, 7
    %v42 = vadd.s32 %v41, 8
    %v43 = vadd.s32 %v41, 16
    %v44 = vadd.s32 %v41, 24
    %v45 = vadd.s32 %v41, 32
    %v46 = vadd.s32 %v41, 40
    %v47 = vadd.s32 %v41, 48
    %v48 = vadd.s32 %v41, 56
    %v49 = vadd.s32 %v41, 64
    %v50 = vadd.s32 %v41, 72
    %v51 = vadd.s32 %v41, 80
    %v52 = vadd.s32 %v41, 88
    %v53 = vadd.s32 %v41, 96
    %v54 = vadd.s32 %v41, 104
    %v55 = vadd.s32 %v41, 112
    %v56 = vadd.s32 %v41, 120
    %v57 = vadd.s32 %v41, 128
    %v58 = vadd.s32 %v41, 136
    %v59 = vadd.s32 %v41, 144
    %v60 = vadd.s32 %v41, 152
    %v61 = vadd.s32 %v41, 160
    %v62 = vadd.s32 %v41, 168
    %v63 = vadd.s32 %v41, 176
    %v64 = vadd.s32 %v41, 184
    %v65 = vadd.s32 %v41, 192
    %v66 = vadd.s32 %v41, 200
    %v67 = vadd.s32 %v41, 208
    %v68 = vadd.s32 %v41, 216
    %v69 = vadd.s32 %v41, 224
    %v70 = vadd.s32 %v41, 232
    %v71 = vadd.s32 %v41, 240
    %v72 = vadd.s32 %v41, 248
    %v73 = vlaneseq
    %v74 = vshrl.u32 %v73, 7
    %v75 = vsub.s32 0, %v74
    %v76 = vrot.slane %v39, %v75
    %vm77 = vcmp.eq.s32.totalorder %v41, %v76
    %vm78 = vcmp.eq.s32.totalorder %v42, %v76
    %vm79 = vcmp.eq.s32.totalorder %v43, %v76
    %vm80 = vcmp.eq.s32.totalorder %v44, %v76
    %vm81 = vcmp.eq.s32.totalorder %v45, %v76
    %vm82 = vcmp.eq.s32.totalorder %v46, %v76
    %vm83 = vcmp.eq.s32.totalorder %v47, %v76
    %vm84 = vcmp.eq.s32.totalorder %v48, %v76
    %vm85 = vcmp.eq.s32.totalorder %v49, %v76
    %vm86 = vcmp.eq.s32.totalorder %v50, %v76
    %vm87 = vcmp.eq.s32.totalorder %v51, %v76
    %vm88 = vcmp.eq.s32.totalorder %v52, %v76
    %vm89 = vcmp.eq.s32.totalorder %v53, %v76
    %vm90 = vcmp.eq.s32.totalorder %v54, %v76
    %vm91 = vcmp.eq.s32.totalorder %v55, %v76
    %vm92 = vcmp.eq.s32.totalorder %v56, %v76
    %vm93 = vcmp.eq.s32.totalorder %v57, %v76
    %vm94 = vcmp.eq.s32.totalorder %v58, %v76
    %vm95 = vcmp.eq.s32.totalorder %v59, %v76
    %vm96 = vcmp.eq.s32.totalorder %v60, %v76
    %vm97 = vcmp.eq.s32.totalorder %v61, %v76
    %vm98 = vcmp.eq.s32.totalorder %v62, %v76
    %vm99 = vcmp.eq.s32.totalorder %v63, %v76
    %vm100 = vcmp.eq.s32.totalorder %v64, %v76
    %vm101 = vcmp.eq.s32.totalorder %v65, %v76
    %vm102 = vcmp.eq.s32.totalorder %v66, %v76
    %vm103 = vcmp.eq.s32.totalorder %v67, %v76
    %vm104 = vcmp.eq.s32.totalorder %v68, %v76
    %vm105 = vcmp.eq.s32.totalorder %v69, %v76
    %vm106 = vcmp.eq.s32.totalorder %v70, %v76
    %vm107 = vcmp.eq.s32.totalorder %v71, %v76
    %vm108 = vcmp.eq.s32.totalorder %v72, %v76
    %v109 = vsel %vm77, 1, 0
    %v110 = vsel %vm78, 1, 0
    %v111 = vsel %vm79, 1, 0
    %v112 = vsel %vm80, 1, 0
    %v113 = vsel %vm81, 1, 0
    %v114 = vsel %vm82, 1, 0
    %v115 = vsel %vm83, 1, 0
    %v116 = vsel %vm84, 1, 0
    %v117 = vsel %vm85, 1, 0
    %v118 = vsel %vm86, 1, 0
    %v119 = vsel %vm87, 1, 0
    %v120 = vsel %vm88, 1, 0
    %v121 = vsel %vm89, 1, 0
    %v122 = vsel %vm90, 1, 0
    %v123 = vsel %vm91, 1, 0
    %v124 = vsel %vm92, 1, 0
    %v125 = vsel %vm93, 1, 0
    %v126 = vsel %vm94, 1, 0
    %v127 = vsel %vm95, 1, 0
    %v128 = vsel %vm96, 1, 0
    %v129 = vsel %vm97, 1, 0
    %v130 = vsel %vm98, 1, 0
    %v131 = vsel %vm99, 1, 0
    %v132 = vsel %vm100, 1, 0
    %v133 = vsel %vm101, 1, 0
    %v134 = vsel %vm102, 1, 0
    %v135 = vsel %vm103, 1, 0
    %v136 = vsel %vm104, 1, 0
    %v137 = vsel %vm105, 1, 0
    %v138 = vsel %vm106, 1, 0
    %v139 = vsel %vm107, 1, 0
    %v140 = vsel %vm108, 1, 0
    %v141 = vcvt.s32.f32 %v109
    %v142 = vcvt.s32.f32 %v110
    %v143 = vcvt.s32.f32 %v111
    %v144 = vcvt.s32.f32 %v112
    %v145 = vcvt.s32.f32 %v113
    %v146 = vcvt.s32.f32 %v114
    %v147 = vcvt.s32.f32 %v115
    %v148 = vcvt.s32.f32 %v116
    %v149 = vcvt.s32.f32 %v117
    %v150 = vcvt.s32.f32 %v118
    %v151 = vcvt.s32.f32 %v119
    %v152 = vcvt.s32.f32 %v120
    %v153 = vcvt.s32.f32 %v121
    %v154 = vcvt.s32.f32 %v122
    %v155 = vcvt.s32.f32 %v123
    %v156 = vcvt.s32.f32 %v124
    %v157 = vcvt.s32.f32 %v125
    %v158 = vcvt.s32.f32 %v126
    %v159 = vcvt.s32.f32 %v127
    %v160 = vcvt.s32.f32 %v128
    %v161 = vcvt.s32.f32 %v129
    %v162 = vcvt.s32.f32 %v130
    %v163 = vcvt.s32.f32 %v131
    %v164 = vcvt.s32.f32 %v132
    %v165 = vcvt.s32.f32 %v133
    %v166 = vcvt.s32.f32 %v134
    %v167 = vcvt.s32.f32 %v135
    %v168 = vcvt.s32.f32 %v136
    %v169 = vcvt.s32.f32 %v137
    %v170 = vcvt.s32.f32 %v138
    %v171 = vcvt.s32.f32 %v139
    %v172 = vcvt.s32.f32 %v140
    %v173 = vpack.c.bf16 %v142, %v141
    %v174 = vpack.c.bf16 %v144, %v143
    %v175 = vpack.c.bf16 %v146, %v145
    %v176 = vpack.c.bf16 %v148, %v147
    %v177 = vpack.c.bf16 %v150, %v149
    %v178 = vpack.c.bf16 %v152, %v151
    %v179 = vpack.c.bf16 %v154, %v153
    %v180 = vpack.c.bf16 %v156, %v155
    %v181 = vpack.c.bf16 %v158, %v157
    %v182 = vpack.c.bf16 %v160, %v159
    %v183 = vpack.c.bf16 %v162, %v161
    %v184 = vpack.c.bf16 %v164, %v163
    %v185 = vpack.c.bf16 %v166, %v165
    %v186 = vpack.c.bf16 %v168, %v167
    %v187 = vpack.c.bf16 %v170, %v169
    %v188 = vpack.c.bf16 %v172, %v171
    %v189 = vld [vmem:[#allocation5] sm:$0xf]
    %v190 = vld [vmem:[#allocation5 + $0x4] sm:$0xf]
    %v191 = vld [vmem:[#allocation5 + $0x8] sm:$0xf]
    %v192 = vld [vmem:[#allocation5 + $0xc] sm:$0xf]
    %v193 = vld [vmem:[#allocation5 + $0x10] sm:$0xf]
    %v194 = vld [vmem:[#allocation5 + $0x14] sm:$0xf]
    %v195 = vld [vmem:[#allocation5 + $0x18] sm:$0xf]
    %v196 = vld [vmem:[#allocation5 + $0x1c] sm:$0xf]
    %v197 = vld [vmem:[#allocation5 + $0x20] sm:$0xf]
    %v198 = vld [vmem:[#allocation5 + $0x24] sm:$0xf]
    %v199 = vld [vmem:[#allocation5 + $0x28] sm:$0xf]
    %v200 = vld [vmem:[#allocation5 + $0x2c] sm:$0xf]
    %v201 = vld [vmem:[#allocation5 + $0x30] sm:$0xf]
    %v202 = vld [vmem:[#allocation5 + $0x34] sm:$0xf]
    %v203 = vld [vmem:[#allocation5 + $0x38] sm:$0xf]
    %v204 = vld [vmem:[#allocation5 + $0x3c] sm:$0xf]
    %v205 = vld [vmem:[#allocation5 + $0x40] sm:$0xf]
    %v206 = vld [vmem:[#allocation5 + $0x44] sm:$0xf]
    %v207 = vld [vmem:[#allocation5 + $0x48] sm:$0xf]
    %v208 = vld [vmem:[#allocation5 + $0x4c] sm:$0xf]
    %v209 = vld [vmem:[#allocation5 + $0x50] sm:$0xf]
    %v210 = vld [vmem:[#allocation5 + $0x54] sm:$0xf]
    %v211 = vld [vmem:[#allocation5 + $0x58] sm:$0xf]
    %v212 = vld [vmem:[#allocation5 + $0x5c] sm:$0xf]
    %v213 = vld [vmem:[#allocation5 + $0x60] sm:$0xf]
    %v214 = vld [vmem:[#allocation5 + $0x64] sm:$0xf]
    %v215 = vld [vmem:[#allocation5 + $0x68] sm:$0xf]
    %v216 = vld [vmem:[#allocation5 + $0x6c] sm:$0xf]
    %v217 = vld [vmem:[#allocation5 + $0x70] sm:$0xf]
    %v218 = vld [vmem:[#allocation5 + $0x74] sm:$0xf]
    %v219 = vld [vmem:[#allocation5 + $0x78] sm:$0xf]
    %v220 = vld [vmem:[#allocation5 + $0x7c] sm:$0xf]
    %221 = vxpose.xlu0.c.b16.start [1/8] %v173, 128
    %222 = vxpose.xlu0.c.b16.cont [2/8] %v174, 128
    %223 = vxpose.xlu0.c.b16.cont [3/8] %v175, 128
    %224 = vxpose.xlu0.c.b16.cont [4/8] %v176, 128
    %225 = vxpose.xlu0.c.b16.cont [5/8] %v177, 128
    %226 = vxpose.xlu0.c.b16.cont [6/8] %v178, 128
    %227 = vxpose.xlu0.c.b16.cont [7/8] %v179, 128
    %228 = vxpose.xlu0.c.b16.end [8/8] %v180, 128
    %v229 = vpop.trf.xlu0
    %v230 = vpop.trf.xlu0
    %v231 = vpop.trf.xlu0
    %v232 = vpop.trf.xlu0
    %v233 = vpop.trf.xlu0
    %v234 = vpop.trf.xlu0
    %v235 = vpop.trf.xlu0
    %v236 = vpop.trf.xlu0
    %237 = vxpose.xlu0.c.b16.start [1/8] %v181, 128
    %238 = vxpose.xlu0.c.b16.cont [2/8] %v182, 128
    %239 = vxpose.xlu0.c.b16.cont [3/8] %v183, 128
    %240 = vxpose.xlu0.c.b16.cont [4/8] %v184, 128
    %241 = vxpose.xlu0.c.b16.cont [5/8] %v185, 128
    %242 = vxpose.xlu0.c.b16.cont [6/8] %v186, 128
    %243 = vxpose.xlu0.c.b16.cont [7/8] %v187, 128
    %244 = vxpose.xlu0.c.b16.end [8/8] %v188, 128
    %v245 = vpop.trf.xlu0
    %v246 = vpop.trf.xlu0
    %v247 = vpop.trf.xlu0
    %v248 = vpop.trf.xlu0
    %v249 = vpop.trf.xlu0
    %v250 = vpop.trf.xlu0
    %v251 = vpop.trf.xlu0
    %v252 = vpop.trf.xlu0
    %v285 = vunpack.c.l.b16 %v189
    %v286 = vunpack.c.l.b16 %v190
    %v287 = vunpack.c.l.b16 %v191
    %v288 = vunpack.c.l.b16 %v192
    %v289 = vunpack.c.l.b16 %v193
    %v290 = vunpack.c.l.b16 %v194
    %v291 = vunpack.c.l.b16 %v195
    %v292 = vunpack.c.l.b16 %v196
    %v293 = vunpack.c.l.b16 %v197
    %v294 = vunpack.c.l.b16 %v198
    %v295 = vunpack.c.l.b16 %v199
    %v296 = vunpack.c.l.b16 %v200
    %v297 = vunpack.c.l.b16 %v201
    %v298 = vunpack.c.l.b16 %v202
    %v299 = vunpack.c.l.b16 %v203
    %v300 = vunpack.c.l.b16 %v204
    %v301 = vunpack.c.l.b16 %v205
    %v302 = vunpack.c.l.b16 %v206
    %v303 = vunpack.c.l.b16 %v207
    %v304 = vunpack.c.l.b16 %v208
    %v305 = vunpack.c.l.b16 %v209
    %v306 = vunpack.c.l.b16 %v210
    %v307 = vunpack.c.l.b16 %v211
    %v308 = vunpack.c.l.b16 %v212
    %v309 = vunpack.c.l.b16 %v213
    %v310 = vunpack.c.l.b16 %v214
    %v311 = vunpack.c.l.b16 %v215
    %v312 = vunpack.c.l.b16 %v216
    %v313 = vunpack.c.l.b16 %v217
    %v314 = vunpack.c.l.b16 %v218
    %v315 = vunpack.c.l.b16 %v219
    %v316 = vunpack.c.l.b16 %v220
    %v317 = vpack.c.b16 %v286, %v285
    %v318 = vpack.c.b16 %v288, %v287
    %v319 = vpack.c.b16 %v290, %v289
    %v320 = vpack.c.b16 %v292, %v291
    %v321 = vpack.c.b16 %v294, %v293
    %v322 = vpack.c.b16 %v296, %v295
    %v323 = vpack.c.b16 %v298, %v297
    %v324 = vpack.c.b16 %v300, %v299
    %v325 = vpack.c.b16 %v302, %v301
    %v326 = vpack.c.b16 %v304, %v303
    %v327 = vpack.c.b16 %v306, %v305
    %v328 = vpack.c.b16 %v308, %v307
    %v329 = vpack.c.b16 %v310, %v309
    %v330 = vpack.c.b16 %v312, %v311
    %v331 = vpack.c.b16 %v314, %v313
    %v332 = vpack.c.b16 %v316, %v315
    %349 = vmatprep.subr.bf16.mxu0 0
    %350 = vmatpush1.bf16.msra.mxu0 %v317
    %351 = vmatprep.subr.bf16.mxu0 0
    %352 = vmatpush1.bf16.msra.mxu0 %v318
    %353 = vmatprep.subr.bf16.mxu0 0
    %354 = vmatpush1.bf16.msra.mxu0 %v319
    %355 = vmatprep.subr.bf16.mxu0 0
    %356 = vmatpush1.bf16.msra.mxu0 %v320
    %357 = vmatprep.subr.bf16.mxu0 0
    %358 = vmatpush1.bf16.msra.mxu0 %v321
    %359 = vmatprep.subr.bf16.mxu0 0
    %360 = vmatpush1.bf16.msra.mxu0 %v322
    %361 = vmatprep.subr.bf16.mxu0 0
    %362 = vmatpush1.bf16.msra.mxu0 %v323
    %363 = vmatprep.subr.bf16.mxu0 0
    %364 = vmatpush1.bf16.msra.mxu0 %v324
    %365 = vmatprep.subr.bf16.mxu0 0
    %366 = vmatpush1.bf16.msra.mxu0 %v325
    %367 = vmatprep.subr.bf16.mxu0 0
    %368 = vmatpush1.bf16.msra.mxu0 %v326
    %369 = vmatprep.subr.bf16.mxu0 0
    %370 = vmatpush1.bf16.msra.mxu0 %v327
    %371 = vmatprep.subr.bf16.mxu0 0
    %372 = vmatpush1.bf16.msra.mxu0 %v328
    %373 = vmatprep.subr.bf16.mxu0 0
    %374 = vmatpush1.bf16.msra.mxu0 %v329
    %375 = vmatprep.subr.bf16.mxu0 0
    %376 = vmatpush1.bf16.msra.mxu0 %v330
    %377 = vmatprep.subr.bf16.mxu0 0
    %378 = vmatpush1.bf16.msra.mxu0 %v331
    %379 = vmatprep.subr.bf16.mxu0 0
    %380 = vmatpush1.bf16.msra.mxu0 %v332
    %381 = vmatprep.mubr.bf16.mxu0 %v245
    %382 = vmatmul.mubr.bf16.gmra.mrb[0].mxu0 %v229
    %v383 = vpop.f32.mrb[0].mxu0
    %v384 = vadd.f32 0.0, %v383
    %v385 = vpop.f32.mrb[0].mxu0
    %v386 = vpop.f32.mrb[0].mxu0
    %v387 = vadd.f32 0.0, %v386
    %v388 = vpop.f32.mrb[0].mxu0
    %389 = vdwg.mxu0
    %v390 = vmul.f32 %v384, 0.088388346
    %v391 = vmul.f32 %v387, 0.088388346
    %v392 = vpack.c.bf16 %v391, %v390
    %v394 = vunpack.c.l.b16 %v392
    %v395 = vunpack.c.h.b16 %v392
    %v396 = vpack.c.b16 %v394, %v394
    %v397 = vpack.c.b16 %v395, %v395
    %400 = vst [vmem:[#allocation7] sm:$0xf] %v396
    %401 = vst [vmem:[#allocation7 + $0x4] sm:$0xf] %v397
    // Predicated region
    $region18: #{tpu_custom_call.1} parent=1 // pred_check
      _
    $region19: #{tpu_custom_call.1} parent=1 // pred_check_branch
      %403 = sbr.rel (0) target = $region21
    $region20: #{tpu_custom_call.1} parent=1 // pred_region
      %s405 = ssub.s32 128, 128
      %406 = vsyncadd [#allocation4], %s405
      %s407 = sshll.u32 [#allocation7], 4
      %s408 = int_to_ptr.vmem [resolvable:$true] %s407
      %413 = dma.vmem_to_hbm [thread:$0]  %s408, 128, %s2, [#allocation4], 64, 64, 4
    $region21: #{tpu_custom_call.1} parent=1 // pred_fallthru
      _
    // Predicated region
    $region22: #{tpu_custom_call.1} parent=1 // pred_check
      _
    $region23: #{tpu_custom_call.1} parent=1 // pred_check_branch
      %415 = sbr.rel (0) target = $region25
    $region24: #{tpu_custom_call.1} parent=1 // pred_region
      %416 = dma.done [#allocation4], 128
    $region25: #{tpu_custom_call.1} parent=1 // pred_fallthru
      _
    %417 = vsyncpa [#allocation3], 1
    %418 = vsyncpa [#allocation6], 1
    %419 = vsyncpa [#allocation4], 1

</llo_original>
